<compile_context>
chip_gen: v7x
topology: tpu7x:2x2x1
jax: 0.10.0
libtpu: 0.0.40
codegen_flags: <defaults>
</compile_context>

<pallas_src>
import functools

import jax
import jax.numpy as jnp
from jax import lax
from jax.experimental import pallas as pl
from jax.experimental.pallas import tpu as pltpu


def _inverted_residual_kernel(x_ref, w1_ref, b1_ref, dw_ref, b2_ref,
                              w2_ref, b3_ref, mask_ref, o_ref, *, H, W):
    """Processes a block of nb batch elements (stride == 1 InvertedResidual).

    x_ref   : (nb, 2, bf, H*W) VMEM bf16  input, channel-split: [:,0]=x1, [:,1]=x2
    w1_ref  : (bf, bf)         VMEM bf16  1x1 conv #1 weight (BN1 scale folded)
    b1_ref  : (bf, 1)          VMEM f32   BN1 folded bias
    dw_ref  : (9, bf, 1)       VMEM f32   3x3 depthwise taps (BN2 scale folded)
    b2_ref  : (bf, 1)          VMEM f32   BN2 folded bias
    w2_ref  : (bf, bf)         VMEM bf16  1x1 conv #2 weight (BN3 scale folded)
    b3_ref  : (bf, 1)          VMEM f32   BN3 folded bias
    mask_ref: (9, 1, H*W)      VMEM f32   0/1 spatial validity mask per tap
    o_ref   : (nb, bf, 2*H*W)  VMEM bf16  output; lanes [0,HW) -> even channels
                                          (x1), lanes [HW,2HW) -> odd channels
                                          (branch2) after channel_shuffle(g=2)
    """
    HW = H * W
    nb = x_ref.shape[0]

    # --- invariants hoisted out of the batch loop (loaded once per step) ---
    w1 = w1_ref[...]                           # (bf, bf) bf16, MXU operand
    w2 = w2_ref[...]                           # (bf, bf) bf16, MXU operand
    b1 = b1_ref[...]                           # (bf, 1)  f32
    b2 = b2_ref[...]
    b3 = b3_ref[...]
    taps = [dw_ref[t] for t in range(9)]       # (bf, 1)  f32 each
    masks = [mask_ref[t] for t in range(9)]    # (1, HW)  f32 each

    shifts = []
    for oh in (-1, 0, 1):
        for ow in (-1, 0, 1):
            shifts.append(oh * W + ow)         # tap 4 == center (0, 0)

    def body(n, carry):
        x1 = x_ref[n, 0]                       # (bf, HW) bf16 passthrough half
        x2 = x_ref[n, 1]                       # (bf, HW) bf16 branch2 input

        # --- branch2 stage 1: 1x1 conv (MXU bf16xbf16 -> f32) + BN1 + ReLU ---
        y1 = jnp.dot(w1, x2, preferred_element_type=jnp.float32)
        y1 = jnp.maximum(y1 + b1, 0.0)

        # --- branch2 stage 2: 3x3 depthwise (stride 1, pad 1) + BN2, f32 ---
        # 9-tap stencil via lane rolls (XLU) + precomputed boundary masks.
        acc = taps[4] * y1                     # center tap: always valid
        for t, s in enumerate(shifts):
            if s != 0:
                contrib = masks[t] * pltpu.roll(y1, shift=(-s) % HW, axis=1)
                acc = acc + taps[t] * contrib
        y2 = acc + b2

        # --- branch2 stage 3: 1x1 conv (MXU) + BN3 + ReLU ---
        z = jnp.dot(w2, y2.astype(jnp.bfloat16),
                    preferred_element_type=jnp.float32)
        z = jnp.maximum(z + b3, 0.0)

        # --- concat + channel_shuffle(groups=2), lane-aligned writeback ---
        # out.view(N, bf, 2, H, W)[:, c, 0] = x1[c], [:, c, 1] = z[c];
        # both stores are full-width and lane-aligned (offsets 0 and HW).
        o_ref[n, :, :HW] = x1
        o_ref[n, :, HW:] = z.astype(o_ref.dtype)
        return carry

    lax.fori_loop(0, nb, body, 0, unroll=True)


def _pick_batch_block(N, target_steps=4, max_nb=4):
    """Largest nb dividing N with >= min(target_steps, N) grid steps."""
    best = 1
    for cand in range(1, min(max_nb, N) + 1):
        if N % cand == 0 and N // cand >= min(target_steps, N):
            best = cand
    return best


def inverted_residual_stride1(x, w1_eff, b1, dw_eff, b2, w2_eff, b3):
    """stride == 1 InvertedResidual forward (BatchNorm folded, eval mode)."""
    N, C, H, W = x.shape
    bf = C // 2
    HW = H * W
    assert C == 2 * bf
    assert HW % 128 == 0, "flattened spatial dim must be lane-aligned"
    # TODO(synk): non-128-multiple H*W (real ShuffleNetV2 sizes 56^2/28^2/14^2/7^2)
    # needs masked edge lanes or W padding, which also changes rolls/masks.

    # Batch elements per grid step: keep >= 4 grid steps (>= 2 for tiny N) so
    # the BlockSpec pipeline overlaps DMA/compute and both v7x TCs get work.
    nb = _pick_batch_block(N)
    steps = N // nb

    # bf16 HBM transport; channel-split + lane-dense reshape (N,C,H,W)->(N,2,bf,HW).
    x4 = x.reshape(N, 2, bf, HW).astype(jnp.bfloat16)

    # Per-channel params as lane-broadcastable f32 columns (VPU math stays f32).
    b1c = b1.reshape(bf, 1).astype(jnp.float32)
    b2c = b2.reshape(bf, 1).astype(jnp.float32)
    b3c = b3.reshape(bf, 1).astype(jnp.float32)
    dw_taps = jnp.transpose(dw_eff.reshape(bf, 9)).reshape(9, bf, 1).astype(jnp.float32)

    # 0/1 validity mask per stencil tap over the flat spatial axis.
    hh = jnp.arange(HW, dtype=jnp.int32) // W
    ww = jnp.arange(HW, dtype=jnp.int32) % W
    masks = []
    for oh in (-1, 0, 1):
        for ow in (-1, 0, 1):
            masks.append((hh + oh >= 0) & (hh + oh < H)
                         & (ww + ow >= 0) & (ww + ow < W))
    tap_mask = jnp.stack(masks).astype(jnp.float32).reshape(9, 1, HW)

    # Explicit scoped-VMEM budget: double-buffered in/out blocks + params,
    # clamped to stay safe on v5e (16 MiB default) and v7x (64 MiB physical).
    in_block_bytes = nb * 2 * bf * HW * 2          # bf16
    out_block_bytes = nb * bf * 2 * HW * 2         # bf16
    param_bytes = 2 * bf * bf * 2 + 3 * bf * 4 + 9 * bf * 4 + 9 * HW * 4
    vmem_limit = int(min(max(4 * (in_block_bytes + out_block_bytes)
                             + 4 * param_bytes + (4 << 20), 32 << 20), 48 << 20))

    vmem = pl.BlockSpec(memory_space=pltpu.MemorySpace.VMEM)
    kernel = functools.partial(_inverted_residual_kernel, H=H, W=W)

    out = pl.pallas_call(
        kernel,
        out_shape=jax.ShapeDtypeStruct((N, bf, 2 * HW), jnp.bfloat16),
        grid=(steps,),
        in_specs=[
            pl.BlockSpec((nb, 2, bf, HW), lambda i: (i, 0, 0, 0)),  # x
            vmem,  # w1_eff (bf16)
            vmem,  # b1
            vmem,  # dw taps
            vmem,  # b2
            vmem,  # w2_eff (bf16)
            vmem,  # b3
            vmem,  # tap masks
        ],
        out_specs=pl.BlockSpec((nb, bf, 2 * HW), lambda i: (i, 0, 0)),
        compiler_params=pltpu.CompilerParams(
            dimension_semantics=("parallel",),
            vmem_limit_bytes=vmem_limit),
        cost_estimate=pl.CostEstimate(
            flops=int(N * HW * (4 * bf * bf + 31 * bf)),
            transcendentals=0,
            bytes_accessed=int(4 * N * C * HW)),      # bf16 in + bf16 out
    )(x4, w1_eff.astype(jnp.bfloat16), b1c, dw_taps, b2c,
      w2_eff.astype(jnp.bfloat16), b3c, tap_mask)

    # (N, bf, 2*H*W) -> (N, C, H, W) is a free contiguous reshape and lands
    # exactly on channel_shuffle(cat(x1, branch2(x2)), groups=2).
    return out.reshape(N, C, H, W)


def _fold_bn(gamma, beta, mean, var, eps=1e-5):
    s = gamma / jnp.sqrt(var + eps)
    b = beta - mean * s
    return s, b


def ref_forward(x, w1_eff, b1, dw_eff, b2, w2_eff, b3):
    """Pure-JAX f32 reference of the stride-1 InvertedResidual forward."""
    N, C, H, W = x.shape
    bf = C // 2
    hi = jax.lax.Precision.HIGHEST
    x1, x2 = x[:, :bf], x[:, bf:]
    y1 = jnp.einsum('oc,nchw->nohw', w1_eff, x2,
                    precision=hi) + b1[None, :, None, None]
    y1 = jnp.maximum(y1, 0.0)
    yp = jnp.pad(y1, ((0, 0), (0, 0), (1, 1), (1, 1)))
    dw3 = dw_eff.reshape(bf, 3, 3)
    y2 = jnp.zeros_like(y1)
    for dh in range(3):
        for dwi in range(3):
            y2 = y2 + (dw3[:, dh, dwi][None, :, None, None]
                       * yp[:, :, dh:dh + H, dwi:dwi + W])
    y2 = y2 + b2[None, :, None, None]
    z = jnp.einsum('oc,nchw->nohw', w2_eff, y2,
                   precision=hi) + b3[None, :, None, None]
    z = jnp.maximum(z, 0.0)
    out = jnp.concatenate([x1, z], axis=1)
    # channel_shuffle, groups=2
    out = out.reshape(N, 2, C // 2, H, W).transpose(0, 2, 1, 3, 4)
    out = out.reshape(N, C, H, W)
    return out


if __name__ == "__main__":
    # Module config: inp = oup = 16, stride = 1  => branch_features = 8
    inp, oup, stride = 16, 16, 1
    bf = oup // 2
    N, H, W = 8, 16, 16          # grid = (4,) with nb = 2 -> pipelined steps

    key = jax.random.PRNGKey(0)
    ks = jax.random.split(key, 16)

    # Raw conv weights (deterministic).
    w1 = 0.1 * jax.random.normal(ks[0], (bf, bf), jnp.float32)    # 1x1 conv #1
    dw = 0.1 * jax.random.normal(ks[1], (bf, 3, 3), jnp.float32)  # 3x3 dwconv
    w2 = 0.1 * jax.random.normal(ks[2], (bf, bf), jnp.float32)    # 1x1 conv #2

    # BatchNorm (eval mode) parameters, deterministic.
    def bn_params(k):
        k1, k2, k3, k4 = jax.random.split(k, 4)
        gamma = 1.0 + 0.1 * jax.random.normal(k1, (bf,), jnp.float32)
        beta = 0.1 * jax.random.normal(k2, (bf,), jnp.float32)
        mean = 0.1 * jax.random.normal(k3, (bf,), jnp.float32)
        var = 1.0 + 0.1 * jnp.abs(jax.random.normal(k4, (bf,), jnp.float32))
        return gamma, beta, mean, var

    g1, be1, m1, v1 = bn_params(ks[3])
    g2, be2, m2, v2 = bn_params(ks[4])
    g3, be3, m3, v3 = bn_params(ks[5])

    s1, b1 = _fold_bn(g1, be1, m1, v1)
    s2, b2 = _fold_bn(g2, be2, m2, v2)
    s3, b3 = _fold_bn(g3, be3, m3, v3)

    w1_eff = w1 * s1[:, None]
    dw_eff = (dw * s2[:, None, None]).reshape(bf, 9)
    w2_eff = w2 * s3[:, None]

    # Input (NCHW, like PyTorch).
    x = jax.random.normal(ks[6], (N, inp, H, W), jnp.float32)

    out = inverted_residual_stride1(x, w1_eff, b1, dw_eff, b2, w2_eff, b3)
    out = jax.block_until_ready(out)
    out_f32 = out.astype(jnp.float32)

    # Reference on the bf16-rounded input (the kernel transports x as bf16);
    # weights/accumulation remain f32 in the reference.
    xq = x.astype(jnp.bfloat16).astype(jnp.float32)
    ref = ref_forward(xq, w1_eff, b1, dw_eff, b2, w2_eff, b3)

    assert out.shape == (N, oup, H, W)
    max_err = float(jnp.max(jnp.abs(out_f32 - ref)))
    assert jnp.allclose(out_f32, ref, atol=2e-2, rtol=2e-2), max_err

    print("KERNEL_OK")
</pallas_src>

<mosaic_0001>
module attributes {stable_mosaic.version = 11 : i64} {
  func.func @_inverted_residual_kernel(%arg0: i32, %arg1: memref<2x2x8x256xbf16, #tpu.memory_space<vmem>>, %arg2: memref<8x8xbf16, #tpu.memory_space<vmem>>, %arg3: memref<8x1xf32, #tpu.memory_space<vmem>>, %arg4: memref<9x8x1xf32, #tpu.memory_space<vmem>>, %arg5: memref<8x1xf32, #tpu.memory_space<vmem>>, %arg6: memref<8x8xbf16, #tpu.memory_space<vmem>>, %arg7: memref<8x1xf32, #tpu.memory_space<vmem>>, %arg8: memref<9x1x256xf32, #tpu.memory_space<vmem>>, %arg9: memref<2x8x512xbf16, #tpu.memory_space<vmem>>) attributes {dimension_semantics = [#tpu.dimension_semantics<parallel>], iteration_bounds = array<i64: 4>, scalar_prefetch = 0 : i64, scratch_operands = 0 : i64, tpu.core_type = #tpu.core_type<tc>, window_params = [{transform_indices = @transform_0, window_bounds = array<i64: 2, 2, 8, 256>}, {pipeline_mode = #tpu.pipeline_mode<synchronous>, transform_indices = @transform_1, window_bounds = array<i64: 8, 8>}, {pipeline_mode = #tpu.pipeline_mode<synchronous>, transform_indices = @transform_2, window_bounds = array<i64: 8, 1>}, {pipeline_mode = #tpu.pipeline_mode<synchronous>, transform_indices = @transform_3, window_bounds = array<i64: 9, 8, 1>}, {pipeline_mode = #tpu.pipeline_mode<synchronous>, transform_indices = @transform_4, window_bounds = array<i64: 8, 1>}, {pipeline_mode = #tpu.pipeline_mode<synchronous>, transform_indices = @transform_5, window_bounds = array<i64: 8, 8>}, {pipeline_mode = #tpu.pipeline_mode<synchronous>, transform_indices = @transform_6, window_bounds = array<i64: 8, 1>}, {pipeline_mode = #tpu.pipeline_mode<synchronous>, transform_indices = @transform_7, window_bounds = array<i64: 9, 1, 256>}, {transform_indices = @transform_8, window_bounds = array<i64: 2, 8, 512>}]} {
    %c0 = arith.constant 0 : index
    %c0_0 = arith.constant 0 : index
    %0 = vector.load %arg2[%c0, %c0_0] : memref<8x8xbf16, #tpu.memory_space<vmem>>, vector<8x8xbf16>
    %c0_1 = arith.constant 0 : index
    %c0_2 = arith.constant 0 : index
    %1 = vector.load %arg6[%c0_1, %c0_2] : memref<8x8xbf16, #tpu.memory_space<vmem>>, vector<8x8xbf16>
    %c0_3 = arith.constant 0 : index
    %c0_4 = arith.constant 0 : index
    %2 = vector.load %arg3[%c0_3, %c0_4] : memref<8x1xf32, #tpu.memory_space<vmem>>, vector<8x1xf32>
    %c0_5 = arith.constant 0 : index
    %c0_6 = arith.constant 0 : index
    %3 = vector.load %arg5[%c0_5, %c0_6] : memref<8x1xf32, #tpu.memory_space<vmem>>, vector<8x1xf32>
    %c0_7 = arith.constant 0 : index
    %c0_8 = arith.constant 0 : index
    %4 = vector.load %arg7[%c0_7, %c0_8] : memref<8x1xf32, #tpu.memory_space<vmem>>, vector<8x1xf32>
    %c0_9 = arith.constant 0 : index
    %c0_10 = arith.constant 0 : index
    %c0_11 = arith.constant 0 : index
    %5 = vector.load %arg4[%c0_9, %c0_10, %c0_11] : memref<9x8x1xf32, #tpu.memory_space<vmem>>, vector<1x8x1xf32>
    %6 = vector.shape_cast %5 : vector<1x8x1xf32> to vector<8x1xf32>
    %c1 = arith.constant 1 : index
    %c0_12 = arith.constant 0 : index
    %c0_13 = arith.constant 0 : index
    %7 = vector.load %arg4[%c1, %c0_12, %c0_13] : memref<9x8x1xf32, #tpu.memory_space<vmem>>, vector<1x8x1xf32>
    %8 = vector.shape_cast %7 : vector<1x8x1xf32> to vector<8x1xf32>
    %c2 = arith.constant 2 : index
    %c0_14 = arith.constant 0 : index
    %c0_15 = arith.constant 0 : index
    %9 = vector.load %arg4[%c2, %c0_14, %c0_15] : memref<9x8x1xf32, #tpu.memory_space<vmem>>, vector<1x8x1xf32>
    %10 = vector.shape_cast %9 : vector<1x8x1xf32> to vector<8x1xf32>
    %c3 = arith.constant 3 : index
    %c0_16 = arith.constant 0 : index
    %c0_17 = arith.constant 0 : index
    %11 = vector.load %arg4[%c3, %c0_16, %c0_17] : memref<9x8x1xf32, #tpu.memory_space<vmem>>, vector<1x8x1xf32>
    %12 = vector.shape_cast %11 : vector<1x8x1xf32> to vector<8x1xf32>
    %c4 = arith.constant 4 : index
    %c0_18 = arith.constant 0 : index
    %c0_19 = arith.constant 0 : index
    %13 = vector.load %arg4[%c4, %c0_18, %c0_19] : memref<9x8x1xf32, #tpu.memory_space<vmem>>, vector<1x8x1xf32>
    %14 = vector.shape_cast %13 : vector<1x8x1xf32> to vector<8x1xf32>
    %c5 = arith.constant 5 : index
    %c0_20 = arith.constant 0 : index
    %c0_21 = arith.constant 0 : index
    %15 = vector.load %arg4[%c5, %c0_20, %c0_21] : memref<9x8x1xf32, #tpu.memory_space<vmem>>, vector<1x8x1xf32>
    %16 = vector.shape_cast %15 : vector<1x8x1xf32> to vector<8x1xf32>
    %c6 = arith.constant 6 : index
    %c0_22 = arith.constant 0 : index
    %c0_23 = arith.constant 0 : index
    %17 = vector.load %arg4[%c6, %c0_22, %c0_23] : memref<9x8x1xf32, #tpu.memory_space<vmem>>, vector<1x8x1xf32>
    %18 = vector.shape_cast %17 : vector<1x8x1xf32> to vector<8x1xf32>
    %c7 = arith.constant 7 : index
    %c0_24 = arith.constant 0 : index
    %c0_25 = arith.constant 0 : index
    %19 = vector.load %arg4[%c7, %c0_24, %c0_25] : memref<9x8x1xf32, #tpu.memory_space<vmem>>, vector<1x8x1xf32>
    %20 = vector.shape_cast %19 : vector<1x8x1xf32> to vector<8x1xf32>
    %c8 = arith.constant 8 : index
    %c0_26 = arith.constant 0 : index
    %c0_27 = arith.constant 0 : index
    %21 = vector.load %arg4[%c8, %c0_26, %c0_27] : memref<9x8x1xf32, #tpu.memory_space<vmem>>, vector<1x8x1xf32>
    %22 = vector.shape_cast %21 : vector<1x8x1xf32> to vector<8x1xf32>
    %c0_28 = arith.constant 0 : index
    %c0_29 = arith.constant 0 : index
    %c0_30 = arith.constant 0 : index
    %23 = vector.load %arg8[%c0_28, %c0_29, %c0_30] : memref<9x1x256xf32, #tpu.memory_space<vmem>>, vector<1x1x256xf32>
    %24 = vector.shape_cast %23 : vector<1x1x256xf32> to vector<1x256xf32>
    %c1_31 = arith.constant 1 : index
    %c0_32 = arith.constant 0 : index
    %c0_33 = arith.constant 0 : index
    %25 = vector.load %arg8[%c1_31, %c0_32, %c0_33] : memref<9x1x256xf32, #tpu.memory_space<vmem>>, vector<1x1x256xf32>
    %26 = vector.shape_cast %25 : vector<1x1x256xf32> to vector<1x256xf32>
    %c2_34 = arith.constant 2 : index
    %c0_35 = arith.constant 0 : index
    %c0_36 = arith.constant 0 : index
    %27 = vector.load %arg8[%c2_34, %c0_35, %c0_36] : memref<9x1x256xf32, #tpu.memory_space<vmem>>, vector<1x1x256xf32>
    %28 = vector.shape_cast %27 : vector<1x1x256xf32> to vector<1x256xf32>
    %c3_37 = arith.constant 3 : index
    %c0_38 = arith.constant 0 : index
    %c0_39 = arith.constant 0 : index
    %29 = vector.load %arg8[%c3_37, %c0_38, %c0_39] : memref<9x1x256xf32, #tpu.memory_space<vmem>>, vector<1x1x256xf32>
    %30 = vector.shape_cast %29 : vector<1x1x256xf32> to vector<1x256xf32>
    %c5_40 = arith.constant 5 : index
    %c0_41 = arith.constant 0 : index
    %c0_42 = arith.constant 0 : index
    %31 = vector.load %arg8[%c5_40, %c0_41, %c0_42] : memref<9x1x256xf32, #tpu.memory_space<vmem>>, vector<1x1x256xf32>
    %32 = vector.shape_cast %31 : vector<1x1x256xf32> to vector<1x256xf32>
    %c6_43 = arith.constant 6 : index
    %c0_44 = arith.constant 0 : index
    %c0_45 = arith.constant 0 : index
    %33 = vector.load %arg8[%c6_43, %c0_44, %c0_45] : memref<9x1x256xf32, #tpu.memory_space<vmem>>, vector<1x1x256xf32>
    %34 = vector.shape_cast %33 : vector<1x1x256xf32> to vector<1x256xf32>
    %c7_46 = arith.constant 7 : index
    %c0_47 = arith.constant 0 : index
    %c0_48 = arith.constant 0 : index
    %35 = vector.load %arg8[%c7_46, %c0_47, %c0_48] : memref<9x1x256xf32, #tpu.memory_space<vmem>>, vector<1x1x256xf32>
    %36 = vector.shape_cast %35 : vector<1x1x256xf32> to vector<1x256xf32>
    %c8_49 = arith.constant 8 : index
    %c0_50 = arith.constant 0 : index
    %c0_51 = arith.constant 0 : index
    %37 = vector.load %arg8[%c8_49, %c0_50, %c0_51] : memref<9x1x256xf32, #tpu.memory_space<vmem>>, vector<1x1x256xf32>
    %38 = vector.shape_cast %37 : vector<1x1x256xf32> to vector<1x256xf32>
    %c0_i32 = arith.constant 0 : i32
    %39 = arith.index_cast %c0_i32 : i32 to index
    %c0_52 = arith.constant 0 : index
    %c0_53 = arith.constant 0 : index
    %c0_54 = arith.constant 0 : index
    %40 = vector.load %arg1[%39, %c0_52, %c0_53, %c0_54] : memref<2x2x8x256xbf16, #tpu.memory_space<vmem>>, vector<1x1x8x256xbf16>
    %41 = vector.shape_cast %40 : vector<1x1x8x256xbf16> to vector<8x256xbf16>
    %42 = arith.index_cast %c0_i32 : i32 to index
    %c1_55 = arith.constant 1 : index
    %c0_56 = arith.constant 0 : index
    %c0_57 = arith.constant 0 : index
    %43 = vector.load %arg1[%42, %c1_55, %c0_56, %c0_57] : memref<2x2x8x256xbf16, #tpu.memory_space<vmem>>, vector<1x1x8x256xbf16>
    %44 = vector.shape_cast %43 : vector<1x1x8x256xbf16> to vector<8x256xbf16>
    %cst = arith.constant dense<0.000000e+00> : vector<8x256xf32>
    %45 = tpu.matmul %0, %44, %cst {dimension_numbers = #tpu.dot_dimension_numbers<[1], [0], [0], [1], [0, 0, 1, 1], [], []>} : vector<8x8xbf16>, vector<8x256xbf16>, vector<8x256xf32> -> vector<8x256xf32>
    %46 = vector.broadcast %2 : vector<8x1xf32> to vector<8x256xf32>
    %47 = arith.addf %45, %46 : vector<8x256xf32>
    %cst_58 = arith.constant 0.000000e+00 : f32
    %48 = vector.broadcast %cst_58 : f32 to vector<8x256xf32>
    %49 = arith.maximumf %47, %48 : vector<8x256xf32>
    %50 = vector.broadcast %14 : vector<8x1xf32> to vector<8x256xf32>
    %51 = arith.mulf %50, %49 : vector<8x256xf32>
    %c17_i32 = arith.constant 17 : i32
    %52 = tpu.dynamic_rotate %49 by %c17_i32 dim 1 : vector<8x256xf32>, i32 -> vector<8x256xf32>
    %53 = vector.broadcast %24 : vector<1x256xf32> to vector<8x256xf32>
    %54 = arith.mulf %53, %52 : vector<8x256xf32>
    %55 = vector.broadcast %6 : vector<8x1xf32> to vector<8x256xf32>
    %56 = arith.mulf %55, %54 : vector<8x256xf32>
    %57 = arith.addf %51, %56 : vector<8x256xf32>
    %c16_i32 = arith.constant 16 : i32
    %58 = tpu.dynamic_rotate %49 by %c16_i32 dim 1 : vector<8x256xf32>, i32 -> vector<8x256xf32>
    %59 = vector.broadcast %26 : vector<1x256xf32> to vector<8x256xf32>
    %60 = arith.mulf %59, %58 : vector<8x256xf32>
    %61 = vector.broadcast %8 : vector<8x1xf32> to vector<8x256xf32>
    %62 = arith.mulf %61, %60 : vector<8x256xf32>
    %63 = arith.addf %57, %62 : vector<8x256xf32>
    %c15_i32 = arith.constant 15 : i32
    %64 = tpu.dynamic_rotate %49 by %c15_i32 dim 1 : vector<8x256xf32>, i32 -> vector<8x256xf32>
    %65 = vector.broadcast %28 : vector<1x256xf32> to vector<8x256xf32>
    %66 = arith.mulf %65, %64 : vector<8x256xf32>
    %67 = vector.broadcast %10 : vector<8x1xf32> to vector<8x256xf32>
    %68 = arith.mulf %67, %66 : vector<8x256xf32>
    %69 = arith.addf %63, %68 : vector<8x256xf32>
    %c1_i32 = arith.constant 1 : i32
    %70 = tpu.dynamic_rotate %49 by %c1_i32 dim 1 : vector<8x256xf32>, i32 -> vector<8x256xf32>
    %71 = vector.broadcast %30 : vector<1x256xf32> to vector<8x256xf32>
    %72 = arith.mulf %71, %70 : vector<8x256xf32>
    %73 = vector.broadcast %12 : vector<8x1xf32> to vector<8x256xf32>
    %74 = arith.mulf %73, %72 : vector<8x256xf32>
    %75 = arith.addf %69, %74 : vector<8x256xf32>
    %c255_i32 = arith.constant 255 : i32
    %76 = tpu.dynamic_rotate %49 by %c255_i32 dim 1 : vector<8x256xf32>, i32 -> vector<8x256xf32>
    %77 = vector.broadcast %32 : vector<1x256xf32> to vector<8x256xf32>
    %78 = arith.mulf %77, %76 : vector<8x256xf32>
    %79 = vector.broadcast %16 : vector<8x1xf32> to vector<8x256xf32>
    %80 = arith.mulf %79, %78 : vector<8x256xf32>
    %81 = arith.addf %75, %80 : vector<8x256xf32>
    %c241_i32 = arith.constant 241 : i32
    %82 = tpu.dynamic_rotate %49 by %c241_i32 dim 1 : vector<8x256xf32>, i32 -> vector<8x256xf32>
    %83 = vector.broadcast %34 : vector<1x256xf32> to vector<8x256xf32>
    %84 = arith.mulf %83, %82 : vector<8x256xf32>
    %85 = vector.broadcast %18 : vector<8x1xf32> to vector<8x256xf32>
    %86 = arith.mulf %85, %84 : vector<8x256xf32>
    %87 = arith.addf %81, %86 : vector<8x256xf32>
    %c240_i32 = arith.constant 240 : i32
    %88 = tpu.dynamic_rotate %49 by %c240_i32 dim 1 : vector<8x256xf32>, i32 -> vector<8x256xf32>
    %89 = vector.broadcast %36 : vector<1x256xf32> to vector<8x256xf32>
    %90 = arith.mulf %89, %88 : vector<8x256xf32>
    %91 = vector.broadcast %20 : vector<8x1xf32> to vector<8x256xf32>
    %92 = arith.mulf %91, %90 : vector<8x256xf32>
    %93 = arith.addf %87, %92 : vector<8x256xf32>
    %c239_i32 = arith.constant 239 : i32
    %94 = tpu.dynamic_rotate %49 by %c239_i32 dim 1 : vector<8x256xf32>, i32 -> vector<8x256xf32>
    %95 = vector.broadcast %38 : vector<1x256xf32> to vector<8x256xf32>
    %96 = arith.mulf %95, %94 : vector<8x256xf32>
    %97 = vector.broadcast %22 : vector<8x1xf32> to vector<8x256xf32>
    %98 = arith.mulf %97, %96 : vector<8x256xf32>
    %99 = arith.addf %93, %98 : vector<8x256xf32>
    %100 = vector.broadcast %3 : vector<8x1xf32> to vector<8x256xf32>
    %101 = arith.addf %99, %100 : vector<8x256xf32>
    %102 = arith.truncf %101 : vector<8x256xf32> to vector<8x256xbf16>
    %cst_59 = arith.constant dense<0.000000e+00> : vector<8x256xf32>
    %103 = tpu.matmul %1, %102, %cst_59 {dimension_numbers = #tpu.dot_dimension_numbers<[1], [0], [0], [1], [0, 0, 1, 1], [], []>} : vector<8x8xbf16>, vector<8x256xbf16>, vector<8x256xf32> -> vector<8x256xf32>
    %104 = vector.broadcast %4 : vector<8x1xf32> to vector<8x256xf32>
    %105 = arith.addf %103, %104 : vector<8x256xf32>
    %cst_60 = arith.constant 0.000000e+00 : f32
    %106 = vector.broadcast %cst_60 : f32 to vector<8x256xf32>
    %107 = arith.maximumf %105, %106 : vector<8x256xf32>
    %108 = arith.index_cast %c0_i32 : i32 to index
    %c0_61 = arith.constant 0 : index
    %c0_62 = arith.constant 0 : index
    %109 = vector.load %arg9[%108, %c0_61, %c0_62] : memref<2x8x512xbf16, #tpu.memory_space<vmem>>, vector<1x8x256xbf16>
    %110 = vector.shape_cast %109 : vector<1x8x256xbf16> to vector<8x256xbf16>
    %111 = vector.shape_cast %41 : vector<8x256xbf16> to vector<1x8x256xbf16>
    tpu.vector_store %arg9[%108, %c0_61, %c0_62], %111 {strides = array<i32>} : memref<2x8x512xbf16, #tpu.memory_space<vmem>>, vector<1x8x256xbf16>,
    %112 = arith.truncf %107 : vector<8x256xf32> to vector<8x256xbf16>
    %113 = arith.index_cast %c0_i32 : i32 to index
    %c0_63 = arith.constant 0 : index
    %c256 = arith.constant 256 : index
    %114 = vector.load %arg9[%113, %c0_63, %c256] : memref<2x8x512xbf16, #tpu.memory_space<vmem>>, vector<1x8x256xbf16>
    %115 = vector.shape_cast %114 : vector<1x8x256xbf16> to vector<8x256xbf16>
    %116 = vector.shape_cast %112 : vector<8x256xbf16> to vector<1x8x256xbf16>
    tpu.vector_store %arg9[%113, %c0_63, %c256], %116 {strides = array<i32>} : memref<2x8x512xbf16, #tpu.memory_space<vmem>>, vector<1x8x256xbf16>,
    %c1_i32_64 = arith.constant 1 : i32
    %117 = arith.index_cast %c1_i32_64 : i32 to index
    %c0_65 = arith.constant 0 : index
    %c0_66 = arith.constant 0 : index
    %c0_67 = arith.constant 0 : index
    %118 = vector.load %arg1[%117, %c0_65, %c0_66, %c0_67] : memref<2x2x8x256xbf16, #tpu.memory_space<vmem>>, vector<1x1x8x256xbf16>
    %119 = vector.shape_cast %118 : vector<1x1x8x256xbf16> to vector<8x256xbf16>
    %120 = arith.index_cast %c1_i32_64 : i32 to index
    %c1_68 = arith.constant 1 : index
    %c0_69 = arith.constant 0 : index
    %c0_70 = arith.constant 0 : index
    %121 = vector.load %arg1[%120, %c1_68, %c0_69, %c0_70] : memref<2x2x8x256xbf16, #tpu.memory_space<vmem>>, vector<1x1x8x256xbf16>
    %122 = vector.shape_cast %121 : vector<1x1x8x256xbf16> to vector<8x256xbf16>
    %cst_71 = arith.constant dense<0.000000e+00> : vector<8x256xf32>
    %123 = tpu.matmul %0, %122, %cst_71 {dimension_numbers = #tpu.dot_dimension_numbers<[1], [0], [0], [1], [0, 0, 1, 1], [], []>} : vector<8x8xbf16>, vector<8x256xbf16>, vector<8x256xf32> -> vector<8x256xf32>
    %124 = vector.broadcast %2 : vector<8x1xf32> to vector<8x256xf32>
    %125 = arith.addf %123, %124 : vector<8x256xf32>
    %cst_72 = arith.constant 0.000000e+00 : f32
    %126 = vector.broadcast %cst_72 : f32 to vector<8x256xf32>
    %127 = arith.maximumf %125, %126 : vector<8x256xf32>
    %128 = vector.broadcast %14 : vector<8x1xf32> to vector<8x256xf32>
    %129 = arith.mulf %128, %127 : vector<8x256xf32>
    %c17_i32_73 = arith.constant 17 : i32
    %130 = tpu.dynamic_rotate %127 by %c17_i32_73 dim 1 : vector<8x256xf32>, i32 -> vector<8x256xf32>
    %131 = vector.broadcast %24 : vector<1x256xf32> to vector<8x256xf32>
    %132 = arith.mulf %131, %130 : vector<8x256xf32>
    %133 = vector.broadcast %6 : vector<8x1xf32> to vector<8x256xf32>
    %134 = arith.mulf %133, %132 : vector<8x256xf32>
    %135 = arith.addf %129, %134 : vector<8x256xf32>
    %c16_i32_74 = arith.constant 16 : i32
    %136 = tpu.dynamic_rotate %127 by %c16_i32_74 dim 1 : vector<8x256xf32>, i32 -> vector<8x256xf32>
    %137 = vector.broadcast %26 : vector<1x256xf32> to vector<8x256xf32>
    %138 = arith.mulf %137, %136 : vector<8x256xf32>
    %139 = vector.broadcast %8 : vector<8x1xf32> to vector<8x256xf32>
    %140 = arith.mulf %139, %138 : vector<8x256xf32>
    %141 = arith.addf %135, %140 : vector<8x256xf32>
    %c15_i32_75 = arith.constant 15 : i32
    %142 = tpu.dynamic_rotate %127 by %c15_i32_75 dim 1 : vector<8x256xf32>, i32 -> vector<8x256xf32>
    %143 = vector.broadcast %28 : vector<1x256xf32> to vector<8x256xf32>
    %144 = arith.mulf %143, %142 : vector<8x256xf32>
    %145 = vector.broadcast %10 : vector<8x1xf32> to vector<8x256xf32>
    %146 = arith.mulf %145, %144 : vector<8x256xf32>
    %147 = arith.addf %141, %146 : vector<8x256xf32>
    %c1_i32_76 = arith.constant 1 : i32
    %148 = tpu.dynamic_rotate %127 by %c1_i32_76 dim 1 : vector<8x256xf32>, i32 -> vector<8x256xf32>
    %149 = vector.broadcast %30 : vector<1x256xf32> to vector<8x256xf32>
    %150 = arith.mulf %149, %148 : vector<8x256xf32>
    %151 = vector.broadcast %12 : vector<8x1xf32> to vector<8x256xf32>
    %152 = arith.mulf %151, %150 : vector<8x256xf32>
    %153 = arith.addf %147, %152 : vector<8x256xf32>
    %c255_i32_77 = arith.constant 255 : i32
    %154 = tpu.dynamic_rotate %127 by %c255_i32_77 dim 1 : vector<8x256xf32>, i32 -> vector<8x256xf32>
    %155 = vector.broadcast %32 : vector<1x256xf32> to vector<8x256xf32>
    %156 = arith.mulf %155, %154 : vector<8x256xf32>
    %157 = vector.broadcast %16 : vector<8x1xf32> to vector<8x256xf32>
    %158 = arith.mulf %157, %156 : vector<8x256xf32>
    %159 = arith.addf %153, %158 : vector<8x256xf32>
    %c241_i32_78 = arith.constant 241 : i32
    %160 = tpu.dynamic_rotate %127 by %c241_i32_78 dim 1 : vector<8x256xf32>, i32 -> vector<8x256xf32>
    %161 = vector.broadcast %34 : vector<1x256xf32> to vector<8x256xf32>
    %162 = arith.mulf %161, %160 : vector<8x256xf32>
    %163 = vector.broadcast %18 : vector<8x1xf32> to vector<8x256xf32>
    %164 = arith.mulf %163, %162 : vector<8x256xf32>
    %165 = arith.addf %159, %164 : vector<8x256xf32>
    %c240_i32_79 = arith.constant 240 : i32
    %166 = tpu.dynamic_rotate %127 by %c240_i32_79 dim 1 : vector<8x256xf32>, i32 -> vector<8x256xf32>
    %167 = vector.broadcast %36 : vector<1x256xf32> to vector<8x256xf32>
    %168 = arith.mulf %167, %166 : vector<8x256xf32>
    %169 = vector.broadcast %20 : vector<8x1xf32> to vector<8x256xf32>
    %170 = arith.mulf %169, %168 : vector<8x256xf32>
    %171 = arith.addf %165, %170 : vector<8x256xf32>
    %c239_i32_80 = arith.constant 239 : i32
    %172 = tpu.dynamic_rotate %127 by %c239_i32_80 dim 1 : vector<8x256xf32>, i32 -> vector<8x256xf32>
    %173 = vector.broadcast %38 : vector<1x256xf32> to vector<8x256xf32>
    %174 = arith.mulf %173, %172 : vector<8x256xf32>
    %175 = vector.broadcast %22 : vector<8x1xf32> to vector<8x256xf32>
    %176 = arith.mulf %175, %174 : vector<8x256xf32>
    %177 = arith.addf %171, %176 : vector<8x256xf32>
    %178 = vector.broadcast %3 : vector<8x1xf32> to vector<8x256xf32>
    %179 = arith.addf %177, %178 : vector<8x256xf32>
    %180 = arith.truncf %179 : vector<8x256xf32> to vector<8x256xbf16>
    %cst_81 = arith.constant dense<0.000000e+00> : vector<8x256xf32>
    %181 = tpu.matmul %1, %180, %cst_81 {dimension_numbers = #tpu.dot_dimension_numbers<[1], [0], [0], [1], [0, 0, 1, 1], [], []>} : vector<8x8xbf16>, vector<8x256xbf16>, vector<8x256xf32> -> vector<8x256xf32>
    %182 = vector.broadcast %4 : vector<8x1xf32> to vector<8x256xf32>
    %183 = arith.addf %181, %182 : vector<8x256xf32>
    %cst_82 = arith.constant 0.000000e+00 : f32
    %184 = vector.broadcast %cst_82 : f32 to vector<8x256xf32>
    %185 = arith.maximumf %183, %184 : vector<8x256xf32>
    %186 = arith.index_cast %c1_i32_64 : i32 to index
    %c0_83 = arith.constant 0 : index
    %c0_84 = arith.constant 0 : index
    %187 = vector.load %arg9[%186, %c0_83, %c0_84] : memref<2x8x512xbf16, #tpu.memory_space<vmem>>, vector<1x8x256xbf16>
    %188 = vector.shape_cast %187 : vector<1x8x256xbf16> to vector<8x256xbf16>
    %189 = vector.shape_cast %119 : vector<8x256xbf16> to vector<1x8x256xbf16>
    tpu.vector_store %arg9[%186, %c0_83, %c0_84], %189 {strides = array<i32>} : memref<2x8x512xbf16, #tpu.memory_space<vmem>>, vector<1x8x256xbf16>,
    %190 = arith.truncf %185 : vector<8x256xf32> to vector<8x256xbf16>
    %191 = arith.index_cast %c1_i32_64 : i32 to index
    %c0_85 = arith.constant 0 : index
    %c256_86 = arith.constant 256 : index
    %192 = vector.load %arg9[%191, %c0_85, %c256_86] : memref<2x8x512xbf16, #tpu.memory_space<vmem>>, vector<1x8x256xbf16>
    %193 = vector.shape_cast %192 : vector<1x8x256xbf16> to vector<8x256xbf16>
    %194 = vector.shape_cast %190 : vector<8x256xbf16> to vector<1x8x256xbf16>
    tpu.vector_store %arg9[%191, %c0_85, %c256_86], %194 {strides = array<i32>} : memref<2x8x512xbf16, #tpu.memory_space<vmem>>, vector<1x8x256xbf16>,
    %c2_i32 = arith.constant 2 : i32
    return
  }
  func.func @transform_0(%arg0: i32) -> (i32, i32, i32, i32) {
    %c0_i32 = arith.constant 0 : i32
    %c0_i32_0 = arith.constant 0 : i32
    %c0_i32_1 = arith.constant 0 : i32
    %c0_i32_2 = arith.constant 0 : i32
    return %arg0, %c0_i32, %c0_i32_0, %c0_i32_1 : i32, i32, i32, i32
  }
  func.func @transform_1(%arg0: i32) -> (i32, i32) {
    %c0_i32 = arith.constant 0 : i32
    %c0_i32_0 = arith.constant 0 : i32
    %c0_i32_1 = arith.constant 0 : i32
    return %c0_i32, %c0_i32_0 : i32, i32
  }
  func.func @transform_2(%arg0: i32) -> (i32, i32) {
    %c0_i32 = arith.constant 0 : i32
    %c0_i32_0 = arith.constant 0 : i32
    %c0_i32_1 = arith.constant 0 : i32
    return %c0_i32, %c0_i32_0 : i32, i32
  }
  func.func @transform_3(%arg0: i32) -> (i32, i32, i32) {
    %c0_i32 = arith.constant 0 : i32
    %c0_i32_0 = arith.constant 0 : i32
    %c0_i32_1 = arith.constant 0 : i32
    %c0_i32_2 = arith.constant 0 : i32
    return %c0_i32, %c0_i32_0, %c0_i32_1 : i32, i32, i32
  }
  func.func @transform_4(%arg0: i32) -> (i32, i32) {
    %c0_i32 = arith.constant 0 : i32
    %c0_i32_0 = arith.constant 0 : i32
    %c0_i32_1 = arith.constant 0 : i32
    return %c0_i32, %c0_i32_0 : i32, i32
  }
  func.func @transform_5(%arg0: i32) -> (i32, i32) {
    %c0_i32 = arith.constant 0 : i32
    %c0_i32_0 = arith.constant 0 : i32
    %c0_i32_1 = arith.constant 0 : i32
    return %c0_i32, %c0_i32_0 : i32, i32
  }
  func.func @transform_6(%arg0: i32) -> (i32, i32) {
    %c0_i32 = arith.constant 0 : i32
    %c0_i32_0 = arith.constant 0 : i32
    %c0_i32_1 = arith.constant 0 : i32
    return %c0_i32, %c0_i32_0 : i32, i32
  }
  func.func @transform_7(%arg0: i32) -> (i32, i32, i32) {
    %c0_i32 = arith.constant 0 : i32
    %c0_i32_0 = arith.constant 0 : i32
    %c0_i32_1 = arith.constant 0 : i32
    %c0_i32_2 = arith.constant 0 : i32
    return %c0_i32, %c0_i32_0, %c0_i32_1 : i32, i32, i32
  }
  func.func @transform_8(%arg0: i32) -> (i32, i32, i32) {
    %c0_i32 = arith.constant 0 : i32
    %c0_i32_0 = arith.constant 0 : i32
    %c0_i32_1 = arith.constant 0 : i32
    return %arg0, %c0_i32, %c0_i32_0 : i32, i32, i32
  }
}

</mosaic_0001>

<llo_original>
// kernel: tpu_custom_call.1
$region0: #{tpu_custom_call.1}
  #allocation0 [shape = 'u32[]', space=smem, size = 0x4, offset = 0x4, fixed_abs, tag = 'smem constant byte address 0x4 - core index']
  #allocation1 [shape = 'u32[144,128]{1,0:T(1,128)}', space=vmem, size = 0x12000, scoped, tag = 'internal scratch']
  %s0 = inlined_call_operand.hbm [shape: bf16[8,2,8,256], index: 0, kind: input, shape index: {}]
  %s1 = inlined_call_operand.vmem [shape: bf16[8,8], index: 1, kind: input, shape index: {}]
  %s2 = inlined_call_operand.vmem [shape: f32[8,1], index: 2, kind: input, shape index: {}]
  %s3 = inlined_call_operand.vmem [shape: f32[9,8,1], index: 3, kind: input, shape index: {}]
  %s4 = inlined_call_operand.vmem [shape: f32[8,1], index: 4, kind: input, shape index: {}]
  %s5 = inlined_call_operand.vmem [shape: bf16[8,8], index: 5, kind: input, shape index: {}]
  %s6 = inlined_call_operand.vmem [shape: f32[8,1], index: 6, kind: input, shape index: {}]
  %s7 = inlined_call_operand.vmem [shape: f32[9,1,256], index: 7, kind: input, shape index: {}]
  %s8 = inlined_call_operand.hbm [shape: bf16[8,8,512], index: 8, kind: output, shape index: {}]
  %s9 = sld [smem:[#allocation0]]
  $region69: #{tpu_custom_call.1} parent=0
    _
  %s11 = ssub.s32 1, %s9
  %s12 = scalar_select 0, %s11, %s9
  $region1: #{tpu_custom_call.1} parent=0
    #allocation2 [shape = 'u8[32768]{0}', space=vmem, size = 0x8000, scoped, tag = 'input window, operand 0']
    #allocation3 [shape = 's32[2]{0}', space=sflag, size = 0x8, scoped, tag = 'scoped memory for tpu_custom_call.1']
    #allocation4 [shape = 's32[2]{0}', space=sflag, size = 0x8, scoped, tag = 'scoped memory for tpu_custom_call.1']
    #allocation5 [shape = 'u8[32768]{0}', space=vmem, size = 0x8000, scoped, tag = 'output window, operand 0']
    %13 = vsyncpa [#allocation3], 0
    %s14 = scalar_lea.sflag [#allocation3], 1
    %15 = vsyncpa %s14, 0
    %16 = vsyncpa [#allocation4], 0
    %s17 = scalar_lea.sflag [#allocation4], 1
    %18 = vsyncpa %s17, 0
    loop: start=0, step=1, limit=6
    $region2: #{tpu_custom_call.1} parent=1 // loop_pre_header
      _
    $region3: #{tpu_custom_call.1} parent=1 // loop_header
      %s20 = sphi 0, %s24
      %p21 = scmp.ge.s32.totalorder %s20, 6
      %s30 = sphi 0, %s32
      %s33 = sphi 0, %s30
      %s34 = sphi 0, %s33
      %s50 = sphi 0, %s34
      %s54 = sphi 0, %s54
      %s56 = sphi 0, %s54
      %s57 = sphi 0, %s56
      %s71 = sphi 0, %s57
      %s75 = sphi 0, %s75
      %s77 = sphi 0, %s75
      %s78 = sphi 0, %s77
      %s92 = sphi 0, %s78
      %s96 = sphi 0, %s96
      %s98 = sphi 0, %s96
      %s99 = sphi 0, %s98
      %s113 = sphi 0, %s99
      %s117 = sphi 0, %s117
      %s119 = sphi 0, %s117
      %s120 = sphi 0, %s119
      %s134 = sphi 0, %s120
      %s138 = sphi 0, %s138
      %s140 = sphi 0, %s138
      %s141 = sphi 0, %s140
      %s155 = sphi 0, %s141
      %s159 = sphi 0, %s159
      %s161 = sphi 0, %s159
      %s162 = sphi 0, %s161
      %s176 = sphi 0, %s162
      %s180 = sphi 0, %s180
      %s182 = sphi 0, %s180
      %s183 = sphi 0, %s182
      %s197 = sphi 0, %s183
      %s203 = sphi 0, %s205
      %s206 = sphi 0, %s203
      %s207 = sphi 0, %s206
      %s223 = sphi 0, %s207
    $region4: #{tpu_custom_call.1} parent=1 // loop_header_branch
      %23 = sbr.rel (%p21) target = $region8
    $region5: #{tpu_custom_call.1} parent=1 // loop_body
      %s25 = ssub.s32 %s20, 1
      %s26 = ssub.s32 %s20, 2
      %s27 = sadd.s32 %s20, 1
      %s28 = ssub.s32 %s20, %s27
      %p29 = scmp.eq.s32.totalorder %s28, 0
      %s31 = sadd.s32 %s30, 1
      %s32 = scalar_select %p29, %s30, %s31
      %p35 = pneg %p29
      %p36 = scmp.eq.s32.totalorder %s20, 3
      %p37 = por %p35, %p36
      %p38 = scmp.ne.s32.totalorder %s30, %s33
      %p39 = scmp.eq.s32.totalorder %s20, 0
      %p40 = por %p38, %p39
      %p41 = scmp.ne.s32.totalorder %s30, %s33
      %p42 = scmp.eq.s32.totalorder %s25, 3
      %p43 = por %p41, %p42
      %p44 = scmp.ne.s32.totalorder %s33, %s34
      %p45 = scmp.eq.s32.totalorder %s25, 0
      %p46 = por %p44, %p45
      %p47 = scmp.ne.s32.totalorder %s33, %s34
      %p48 = scmp.eq.s32.totalorder %s26, 3
      %p49 = por %p47, %p48
      %p51 = scmp.ne.s32.totalorder %s34, %s50
      %p52 = scmp.eq.s32.totalorder %s26, 0
      %p53 = por %p51, %p52
      %s55 = sadd.s32 %s54, 1
      %p58 = scmp.eq.s32.totalorder %s20, 3
      %p59 = scmp.ne.s32.totalorder %s54, %s56
      %p60 = scmp.eq.s32.totalorder %s20, 0
      %p61 = por %p59, %p60
      %p62 = scmp.ne.s32.totalorder %s54, %s56
      %p63 = scmp.eq.s32.totalorder %s25, 3
      %p64 = por %p62, %p63
      %p65 = scmp.ne.s32.totalorder %s56, %s57
      %p66 = scmp.eq.s32.totalorder %s25, 0
      %p67 = por %p65, %p66
      %p68 = scmp.ne.s32.totalorder %s56, %s57
      %p69 = scmp.eq.s32.totalorder %s26, 3
      %p70 = por %p68, %p69
      %p72 = scmp.ne.s32.totalorder %s57, %s71
      %p73 = scmp.eq.s32.totalorder %s26, 0
      %p74 = por %p72, %p73
      %s76 = sadd.s32 %s75, 1
      %p79 = scmp.eq.s32.totalorder %s20, 3
      %p80 = scmp.ne.s32.totalorder %s75, %s77
      %p81 = scmp.eq.s32.totalorder %s20, 0
      %p82 = por %p80, %p81
      %p83 = scmp.ne.s32.totalorder %s75, %s77
      %p84 = scmp.eq.s32.totalorder %s25, 3
      %p85 = por %p83, %p84
      %p86 = scmp.ne.s32.totalorder %s77, %s78
      %p87 = scmp.eq.s32.totalorder %s25, 0
      %p88 = por %p86, %p87
      %p89 = scmp.ne.s32.totalorder %s77, %s78
      %p90 = scmp.eq.s32.totalorder %s26, 3
      %p91 = por %p89, %p90
      %p93 = scmp.ne.s32.totalorder %s78, %s92
      %p94 = scmp.eq.s32.totalorder %s26, 0
      %p95 = por %p93, %p94
      %s97 = sadd.s32 %s96, 1
      %p100 = scmp.eq.s32.totalorder %s20, 3
      %p101 = scmp.ne.s32.totalorder %s96, %s98
      %p102 = scmp.eq.s32.totalorder %s20, 0
      %p103 = por %p101, %p102
      %p104 = scmp.ne.s32.totalorder %s96, %s98
      %p105 = scmp.eq.s32.totalorder %s25, 3
      %p106 = por %p104, %p105
      %p107 = scmp.ne.s32.totalorder %s98, %s99
      %p108 = scmp.eq.s32.totalorder %s25, 0
      %p109 = por %p107, %p108
      %p110 = scmp.ne.s32.totalorder %s98, %s99
      %p111 = scmp.eq.s32.totalorder %s26, 3
      %p112 = por %p110, %p111
      %p114 = scmp.ne.s32.totalorder %s99, %s113
      %p115 = scmp.eq.s32.totalorder %s26, 0
      %p116 = por %p114, %p115
      %s118 = sadd.s32 %s117, 1
      %p121 = scmp.eq.s32.totalorder %s20, 3
      %p122 = scmp.ne.s32.totalorder %s117, %s119
      %p123 = scmp.eq.s32.totalorder %s20, 0
      %p124 = por %p122, %p123
      %p125 = scmp.ne.s32.totalorder %s117, %s119
      %p126 = scmp.eq.s32.totalorder %s25, 3
      %p127 = por %p125, %p126
      %p128 = scmp.ne.s32.totalorder %s119, %s120
      %p129 = scmp.eq.s32.totalorder %s25, 0
      %p130 = por %p128, %p129
      %p131 = scmp.ne.s32.totalorder %s119, %s120
      %p132 = scmp.eq.s32.totalorder %s26, 3
      %p133 = por %p131, %p132
      %p135 = scmp.ne.s32.totalorder %s120, %s134
      %p136 = scmp.eq.s32.totalorder %s26, 0
      %p137 = por %p135, %p136
      %s139 = sadd.s32 %s138, 1
      %p142 = scmp.eq.s32.totalorder %s20, 3
      %p143 = scmp.ne.s32.totalorder %s138, %s140
      %p144 = scmp.eq.s32.totalorder %s20, 0
      %p145 = por %p143, %p144
      %p146 = scmp.ne.s32.totalorder %s138, %s140
      %p147 = scmp.eq.s32.totalorder %s25, 3
      %p148 = por %p146, %p147
      %p149 = scmp.ne.s32.totalorder %s140, %s141
      %p150 = scmp.eq.s32.totalorder %s25, 0
      %p151 = por %p149, %p150
      %p152 = scmp.ne.s32.totalorder %s140, %s141
      %p153 = scmp.eq.s32.totalorder %s26, 3
      %p154 = por %p152, %p153
      %p156 = scmp.ne.s32.totalorder %s141, %s155
      %p157 = scmp.eq.s32.totalorder %s26, 0
      %p158 = por %p156, %p157
      %s160 = sadd.s32 %s159, 1
      %p163 = scmp.eq.s32.totalorder %s20, 3
      %p164 = scmp.ne.s32.totalorder %s159, %s161
      %p165 = scmp.eq.s32.totalorder %s20, 0
      %p166 = por %p164, %p165
      %p167 = scmp.ne.s32.totalorder %s159, %s161
      %p168 = scmp.eq.s32.totalorder %s25, 3
      %p169 = por %p167, %p168
      %p170 = scmp.ne.s32.totalorder %s161, %s162
      %p171 = scmp.eq.s32.totalorder %s25, 0
      %p172 = por %p170, %p171
      %p173 = scmp.ne.s32.totalorder %s161, %s162
      %p174 = scmp.eq.s32.totalorder %s26, 3
      %p175 = por %p173, %p174
      %p177 = scmp.ne.s32.totalorder %s162, %s176
      %p178 = scmp.eq.s32.totalorder %s26, 0
      %p179 = por %p177, %p178
      %s181 = sadd.s32 %s180, 1
      %p184 = scmp.eq.s32.totalorder %s20, 3
      %p185 = scmp.ne.s32.totalorder %s180, %s182
      %p186 = scmp.eq.s32.totalorder %s20, 0
      %p187 = por %p185, %p186
      %p188 = scmp.ne.s32.totalorder %s180, %s182
      %p189 = scmp.eq.s32.totalorder %s25, 3
      %p190 = por %p188, %p189
      %p191 = scmp.ne.s32.totalorder %s182, %s183
      %p192 = scmp.eq.s32.totalorder %s25, 0
      %p193 = por %p191, %p192
      %p194 = scmp.ne.s32.totalorder %s182, %s183
      %p195 = scmp.eq.s32.totalorder %s26, 3
      %p196 = por %p194, %p195
      %p198 = scmp.ne.s32.totalorder %s183, %s197
      %p199 = scmp.eq.s32.totalorder %s26, 0
      %p200 = por %p198, %p199
      %s201 = ssub.s32 %s20, %s27
      %p202 = scmp.eq.s32.totalorder %s201, 0
      %s204 = sadd.s32 %s203, 1
      %s205 = scalar_select %p202, %s203, %s204
      %p208 = pneg %p202
      %p209 = scmp.eq.s32.totalorder %s20, 3
      %p210 = por %p208, %p209
      %p211 = scmp.ne.s32.totalorder %s203, %s206
      %p212 = scmp.eq.s32.totalorder %s20, 0
      %p213 = por %p211, %p212
      %p214 = scmp.ne.s32.totalorder %s203, %s206
      %p215 = scmp.eq.s32.totalorder %s25, 3
      %p216 = por %p214, %p215
      %p217 = scmp.ne.s32.totalorder %s206, %s207
      %p218 = scmp.eq.s32.totalorder %s25, 0
      %p219 = por %p217, %p218
      %p220 = scmp.ne.s32.totalorder %s206, %s207
      %p221 = scmp.eq.s32.totalorder %s26, 3
      %p222 = por %p220, %p221
      %p224 = scmp.ne.s32.totalorder %s207, %s223
      %p225 = scmp.eq.s32.totalorder %s26, 0
      %p226 = por %p224, %p225
      %p227 = scmp.le.s32.totalorder 1, %s20
      %p228 = scmp.lt.s32.totalorder %s20, 5
      %p229 = pnand %p227, %p228
      %p230 = pneg %p229
      // Predicated region
      $region9: #{tpu_custom_call.1} parent=5 // pred_check
        _
      $region10: #{tpu_custom_call.1} parent=5 // pred_check_branch
        %232 = sbr.rel (%p229) target = $region12
      $region11: #{tpu_custom_call.1} parent=5 // pred_region
        %s233 = ssub.s32 %s20, 1
        // Predicated region
        $region13: #{tpu_custom_call.1} parent=11 // pred_check
          %p234 = pneg %p67
        $region14: #{tpu_custom_call.1} parent=11 // pred_check_branch
          %236 = sbr.rel (%p234) target = $region16
        $region15: #{tpu_custom_call.1} parent=11 // pred_region
          _
        $region16: #{tpu_custom_call.1} parent=11 // pred_fallthru
          _
        // Predicated region
        $region17: #{tpu_custom_call.1} parent=11 // pred_check
          %p237 = pneg %p88
        $region18: #{tpu_custom_call.1} parent=11 // pred_check_branch
          %239 = sbr.rel (%p237) target = $region20
        $region19: #{tpu_custom_call.1} parent=11 // pred_region
          _
        $region20: #{tpu_custom_call.1} parent=11 // pred_fallthru
          _
        // Predicated region
        $region21: #{tpu_custom_call.1} parent=11 // pred_check
          %p240 = pneg %p109
        $region22: #{tpu_custom_call.1} parent=11 // pred_check_branch
          %242 = sbr.rel (%p240) target = $region24
        $region23: #{tpu_custom_call.1} parent=11 // pred_region
          _
        $region24: #{tpu_custom_call.1} parent=11 // pred_fallthru
          _
        // Predicated region
        $region25: #{tpu_custom_call.1} parent=11 // pred_check
          %p243 = pneg %p130
        $region26: #{tpu_custom_call.1} parent=11 // pred_check_branch
          %245 = sbr.rel (%p243) target = $region28
        $region27: #{tpu_custom_call.1} parent=11 // pred_region
          _
        $region28: #{tpu_custom_call.1} parent=11 // pred_fallthru
          _
        // Predicated region
        $region29: #{tpu_custom_call.1} parent=11 // pred_check
          %p246 = pneg %p151
        $region30: #{tpu_custom_call.1} parent=11 // pred_check_branch
          %248 = sbr.rel (%p246) target = $region32
        $region31: #{tpu_custom_call.1} parent=11 // pred_region
          _
        $region32: #{tpu_custom_call.1} parent=11 // pred_fallthru
          _
        // Predicated region
        $region33: #{tpu_custom_call.1} parent=11 // pred_check
          %p249 = pneg %p172
        $region34: #{tpu_custom_call.1} parent=11 // pred_check_branch
          %251 = sbr.rel (%p249) target = $region36
        $region35: #{tpu_custom_call.1} parent=11 // pred_region
          _
        $region36: #{tpu_custom_call.1} parent=11 // pred_fallthru
          _
        // Predicated region
        $region37: #{tpu_custom_call.1} parent=11 // pred_check
          %p252 = pneg %p193
        $region38: #{tpu_custom_call.1} parent=11 // pred_check_branch
          %254 = sbr.rel (%p252) target = $region40
        $region39: #{tpu_custom_call.1} parent=11 // pred_region
          _
        $region40: #{tpu_custom_call.1} parent=11 // pred_fallthru
          _
      $region12: #{tpu_custom_call.1} parent=5 // pred_fallthru
        _
      %p255 = scmp.lt.s32.totalorder %s20, 4
      // Predicated region
      $region41: #{tpu_custom_call.1} parent=5 // pred_check
        %p256 = pneg %p255
      $region42: #{tpu_custom_call.1} parent=5 // pred_check_branch
        %258 = sbr.rel (%p256) target = $region44
      $region43: #{tpu_custom_call.1} parent=5 // pred_region
        // Predicated region
        $region45: #{tpu_custom_call.1} parent=43 // pred_check
          %p259 = pneg %p40
        $region46: #{tpu_custom_call.1} parent=43 // pred_check_branch
          %261 = sbr.rel (%p259) target = $region48
        $region47: #{tpu_custom_call.1} parent=43 // pred_region
          %s262 = sand.u32 %s30, 1
          %s263 = scalar_lea.sflag [#allocation3], %s262
          %s264 = sand.u32 %s30, 1
          %s265 = smul.addr %s264, 32
          %s266 = scalar_lea.vmem [#allocation2], %s265
          %s267 = smul.u32 2, %s20
          %s269 = ssub.s32 512, 512
          %270 = vsyncadd %s263, %s269
          %s271 = smul.addr %s267, 4
          %s272 = smul.addr %s271, 64
          %s273 = scalar_lea.hbm %s0, %s272
          %s274 = sshll.u32 %s266, 4
          %s275 = int_to_ptr.vmem [resolvable:$true] %s274
          %280 = dma.hbm_to_vmem [thread:$0]  %s273, 512, %s275, %s263, 128, 128, 8
        $region48: #{tpu_custom_call.1} parent=43 // pred_fallthru
          _
      $region44: #{tpu_custom_call.1} parent=5 // pred_fallthru
        _
      %p281 = scmp.le.s32.totalorder 1, %s20
      %p282 = scmp.lt.s32.totalorder %s20, 5
      %p283 = pnand %p281, %p282
      %p284 = pneg %p283
      // Predicated region
      $region49: #{tpu_custom_call.1} parent=5 // pred_check
        _
      $region50: #{tpu_custom_call.1} parent=5 // pred_check_branch
        %286 = sbr.rel (%p283) target = $region52
      $region51: #{tpu_custom_call.1} parent=5 // pred_region
        %s287 = ssub.s32 %s20, 1
        %s288 = sand.u32 %s33, 1
        %s289 = scalar_lea.sflag [#allocation3], %s288
        %s290 = sand.u32 %s33, 1
        %s291 = smul.addr %s290, 32
        %s292 = scalar_lea.vmem [#allocation2], %s291
        // Predicated region
        $region53: #{tpu_custom_call.1} parent=51 // pred_check
          %p293 = pneg %p46
        $region54: #{tpu_custom_call.1} parent=51 // pred_check_branch
          %295 = sbr.rel (%p293) target = $region56
        $region55: #{tpu_custom_call.1} parent=51 // pred_region
          %296 = dma.done %s289, 512
        $region56: #{tpu_custom_call.1} parent=51 // pred_fallthru
          _
        %s297 = sand.u32 %s33, 1
        %s298 = scalar_lea.sflag [#allocation3], %s297
        %s299 = sand.u32 %s33, 1
        %s300 = smul.addr %s299, 32
        %s301 = scalar_lea.vmem [#allocation2], %s300
        %p302 = pneg %p46
        %p303 = pneg %p43
        %p304 = pneg %p67
        %p305 = pneg %p64
        %p306 = pneg %p88
        %p307 = pneg %p85
        %p308 = pneg %p109
        %p309 = pneg %p106
        %p310 = pneg %p130
        %p311 = pneg %p127
        %p312 = pneg %p151
        %p313 = pneg %p148
        %p314 = pneg %p172
        %p315 = pneg %p169
        %p316 = pneg %p193
        %p317 = pneg %p190
        %p318 = pneg %p219
        %p319 = pneg %p216
        %s320 = sand.u32 %s206, 1
        %s321 = scalar_lea.sflag [#allocation4], %s320
        %s322 = sand.u32 %s206, 1
        %s323 = smul.addr %s322, 32
        %s324 = scalar_lea.vmem [#allocation5], %s323
        %s325 = smul.u32 2, %s25
        %s326 = smul.u32 2, %s25
        %v328 = vld [vmem:[%s1] sm:$0xf]
        %v329 = vld [vmem:[%s5] sm:$0xf]
        %v330 = vld [vmem:[%s2] sm:$0xff]
        %v331 = vld [vmem:[%s4] sm:$0xff]
        %v332 = vld [vmem:[%s6] sm:$0xff]
        %v333 = vld [vmem:[%s3] sm:$0xff]
        %s334 = scalar_lea.vmem %s3, 8
        %v335 = vld [vmem:[%s334] sm:$0xff]
        %s336 = scalar_lea.vmem %s3, 16
        %v337 = vld [vmem:[%s336] sm:$0xff]
        %s338 = scalar_lea.vmem %s3, 24
        %v339 = vld [vmem:[%s338] sm:$0xff]
        %s340 = scalar_lea.vmem %s3, 32
        %v341 = vld [vmem:[%s340] sm:$0xff]
        %s342 = scalar_lea.vmem %s3, 40
        %v343 = vld [vmem:[%s342] sm:$0xff]
        %s344 = scalar_lea.vmem %s3, 48
        %v345 = vld [vmem:[%s344] sm:$0xff]
        %s346 = scalar_lea.vmem %s3, 56
        %v347 = vld [vmem:[%s346] sm:$0xff]
        %s348 = scalar_lea.vmem %s3, 64
        %v349 = vld [vmem:[%s348] sm:$0xff]
        %v350 = vld [vmem:[%s7] sm:$0x3]
        %s351 = scalar_lea.vmem %s7, 2
        %v352 = vld [vmem:[%s351] sm:$0x3]
        %s353 = scalar_lea.vmem %s7, 4
        %v354 = vld [vmem:[%s353] sm:$0x3]
        %s355 = scalar_lea.vmem %s7, 6
        %v356 = vld [vmem:[%s355] sm:$0x3]
        %s357 = scalar_lea.vmem %s7, 10
        %v358 = vld [vmem:[%s357] sm:$0x3]
        %s359 = scalar_lea.vmem %s7, 12
        %v360 = vld [vmem:[%s359] sm:$0x3]
        %s361 = scalar_lea.vmem %s7, 14
        %v362 = vld [vmem:[%s361] sm:$0x3]
        %s363 = scalar_lea.vmem %s7, 16
        %v364 = vld [vmem:[%s363] sm:$0x3]
        %v365 = vld [vmem:[%s292] sm:$0xff]
        %s366 = scalar_lea.vmem %s292, 8 [#allocation2]
        %v367 = vld [vmem:[%s366] sm:$0xff]
        %369 = vset.pattern.permute.xlu0 0
        %370 = vperm.xlu0 %369, %v330
        %v371 = vpop.permute.xlu0 %370
        %v374 = vunpack.c.l.b16 %v367
        %v375 = vunpack.c.h.b16 %v367
        %v376 = vpack.c.b16 %v374, %v374
        %v377 = vpack.c.b16 %v375, %v375
        %vm378 = vcmask 64512
        %v380 = vsel %vm378, %v328, 0
        %vm382 = vcmask 1043456
        %v384 = vsel %vm382, %v376, 0
        %v387 = vsel %vm382, %v377, 0
        %389 = vmatprep.subr.bf16.mxu0 %v387
        %390 = vmatpush1.bf16.msra.mxu0 %v384
        %391 = vmatprep.subr.bf16.mxu0 0
        %392 = vmatpush1.bf16.msra.mxu0 0
        %393 = vmatprep.subr.bf16.mxu0 0
        %394 = vmatpush1.bf16.msra.mxu0 0
        %395 = vmatprep.subr.bf16.mxu0 0
        %396 = vmatpush1.bf16.msra.mxu0 0
        %397 = vmatprep.subr.bf16.mxu0 0
        %398 = vmatpush1.bf16.msra.mxu0 0
        %399 = vmatprep.subr.bf16.mxu0 0
        %400 = vmatpush1.bf16.msra.mxu0 0
        %401 = vmatprep.subr.bf16.mxu0 0
        %402 = vmatpush1.bf16.msra.mxu0 0
        %403 = vmatprep.subr.bf16.mxu0 0
        %404 = vmatpush1.bf16.msra.mxu0 0
        %405 = vmatprep.subr.bf16.mxu0 0
        %406 = vmatpush1.bf16.msra.mxu0 0
        %407 = vmatprep.subr.bf16.mxu0 0
        %408 = vmatpush1.bf16.msra.mxu0 0
        %409 = vmatprep.subr.bf16.mxu0 0
        %410 = vmatpush1.bf16.msra.mxu0 0
        %411 = vmatprep.subr.bf16.mxu0 0
        %412 = vmatpush1.bf16.msra.mxu0 0
        %413 = vmatprep.subr.bf16.mxu0 0
        %414 = vmatpush1.bf16.msra.mxu0 0
        %415 = vmatprep.subr.bf16.mxu0 0
        %416 = vmatpush1.bf16.msra.mxu0 0
        %417 = vmatprep.subr.bf16.mxu0 0
        %418 = vmatpush1.bf16.msra.mxu0 0
        %419 = vmatprep.subr.bf16.mxu0 0
        %420 = vmatpush1.bf16.msra.mxu0 0
        %421 = vmatprep.mubr.bf16.mxu0 0
        %422 = vmatmul.mubr.bf16.gmra.mrb[0].mxu0 %v380
        %v423 = vpop.f32.mrb[0].mxu0
        %v424 = vadd.f32 %v371, %v423
        %v425 = vpop.f32.mrb[0].mxu0
        %v426 = vadd.f32 %v371, %v425
        %v427 = vpop.f32.mrb[0].mxu0
        %v428 = vpop.f32.mrb[0].mxu0
        %429 = vdwg.mxu0
        %v430 = vmax.f32 %v424, 0.0
        %v431 = vmax.f32 %v426, 0.0
        %433 = vset.pattern.permute.xlu0 0
        %434 = vperm.xlu0 %433, %v341
        %v435 = vpop.permute.xlu0 %434
        %v437 = vmul.f32 %v435, %v430
        %v438 = vmul.f32 %v435, %v431
        %439 = vrot.lane.b32.xlu0 %v430, 17
        %v440 = vpop.permute.xlu0 %439
        %441 = vrot.lane.b32.xlu0 %v431, 17
        %v442 = vpop.permute.xlu0 %441
        %v443 = vlaneseq
        %v444 = vand.u32 %v443, 127
        %vm445 = vcmp.lt.s32.totalorder %v444, 17
        %v446 = vsel %vm445, %v440, %v442
        %v447 = vsel %vm445, %v442, %v440
        %v449 = vlaneseq
        %v450 = vshrl.u32 %v449, 7
        %v451 = vsub.s32 0, %v450
        %v452 = vrot.slane %v350, %v451
        %v453 = vlaneseq
        %v454 = vshrl.u32 %v453, 7
        %v455 = vsub.s32 1, %v454
        %v456 = vrot.slane %v350, %v455
        %v459 = vmul.f32 %v452, %v447
        %v460 = vmul.f32 %v456, %v446
        %462 = vset.pattern.permute.xlu0 0
        %463 = vperm.xlu0 %462, %v333
        %v464 = vpop.permute.xlu0 %463
        %v466 = vmul.f32 %v464, %v459
        %v467 = vmul.f32 %v464, %v460
        %v468 = vadd.f32 %v437, %v466
        %v469 = vadd.f32 %v438, %v467
        %470 = vrot.lane.b32.xlu0 %v430, 16
        %v471 = vpop.permute.xlu0 %470
        %472 = vrot.lane.b32.xlu0 %v431, 16
        %v473 = vpop.permute.xlu0 %472
        %vm474 = vcmp.lt.s32.totalorder %v444, 16
        %v475 = vsel %vm474, %v471, %v473
        %v476 = vsel %vm474, %v473, %v471
        %v478 = vlaneseq
        %v479 = vshrl.u32 %v478, 7
        %v480 = vsub.s32 0, %v479
        %v481 = vrot.slane %v352, %v480
        %v482 = vlaneseq
        %v483 = vshrl.u32 %v482, 7
        %v484 = vsub.s32 1, %v483
        %v485 = vrot.slane %v352, %v484
        %v488 = vmul.f32 %v481, %v476
        %v489 = vmul.f32 %v485, %v475
        %491 = vset.pattern.permute.xlu0 0
        %492 = vperm.xlu0 %491, %v335
        %v493 = vpop.permute.xlu0 %492
        %v495 = vmul.f32 %v493, %v488
        %v496 = vmul.f32 %v493, %v489
        %v497 = vadd.f32 %v468, %v495
        %v498 = vadd.f32 %v469, %v496
        %499 = vrot.lane.b32.xlu0 %v430, 15
        %v500 = vpop.permute.xlu0 %499
        %501 = vrot.lane.b32.xlu0 %v431, 15
        %v502 = vpop.permute.xlu0 %501
        %vm503 = vcmp.lt.s32.totalorder %v444, 15
        %v504 = vsel %vm503, %v500, %v502
        %v505 = vsel %vm503, %v502, %v500
        %v507 = vlaneseq
        %v508 = vshrl.u32 %v507, 7
        %v509 = vsub.s32 0, %v508
        %v510 = vrot.slane %v354, %v509
        %v511 = vlaneseq
        %v512 = vshrl.u32 %v511, 7
        %v513 = vsub.s32 1, %v512
        %v514 = vrot.slane %v354, %v513
        %v517 = vmul.f32 %v510, %v505
        %v518 = vmul.f32 %v514, %v504
        %520 = vset.pattern.permute.xlu0 0
        %521 = vperm.xlu0 %520, %v337
        %v522 = vpop.permute.xlu0 %521
        %v524 = vmul.f32 %v522, %v517
        %v525 = vmul.f32 %v522, %v518
        %v526 = vadd.f32 %v497, %v524
        %v527 = vadd.f32 %v498, %v525
        %528 = vrot.lane.b32.xlu0 %v430, 1
        %v529 = vpop.permute.xlu0 %528
        %530 = vrot.lane.b32.xlu0 %v431, 1
        %v531 = vpop.permute.xlu0 %530
        %vm532 = vcmp.lt.s32.totalorder %v444, 1
        %v533 = vsel %vm532, %v529, %v531
        %v534 = vsel %vm532, %v531, %v529
        %v536 = vlaneseq
        %v537 = vshrl.u32 %v536, 7
        %v538 = vsub.s32 0, %v537
        %v539 = vrot.slane %v356, %v538
        %v540 = vlaneseq
        %v541 = vshrl.u32 %v540, 7
        %v542 = vsub.s32 1, %v541
        %v543 = vrot.slane %v356, %v542
        %v546 = vmul.f32 %v539, %v534
        %v547 = vmul.f32 %v543, %v533
        %549 = vset.pattern.permute.xlu0 0
        %550 = vperm.xlu0 %549, %v339
        %v551 = vpop.permute.xlu0 %550
        %v553 = vmul.f32 %v551, %v546
        %v554 = vmul.f32 %v551, %v547
        %v555 = vadd.f32 %v526, %v553
        %v556 = vadd.f32 %v527, %v554
        %557 = vrot.lane.b32.xlu0 %v430, 127
        %v558 = vpop.permute.xlu0 %557
        %559 = vrot.lane.b32.xlu0 %v431, 127
        %v560 = vpop.permute.xlu0 %559
        %vm561 = vcmp.lt.s32.totalorder %v444, 127
        %v562 = vsel %vm561, %v558, %v560
        %v563 = vsel %vm561, %v560, %v558
        %v565 = vlaneseq
        %v566 = vshrl.u32 %v565, 7
        %v567 = vsub.s32 0, %v566
        %v568 = vrot.slane %v358, %v567
        %v569 = vlaneseq
        %v570 = vshrl.u32 %v569, 7
        %v571 = vsub.s32 1, %v570
        %v572 = vrot.slane %v358, %v571
        %v575 = vmul.f32 %v568, %v562
        %v576 = vmul.f32 %v572, %v563
        %578 = vset.pattern.permute.xlu0 0
        %579 = vperm.xlu0 %578, %v343
        %v580 = vpop.permute.xlu0 %579
        %v582 = vmul.f32 %v580, %v575
        %v583 = vmul.f32 %v580, %v576
        %v584 = vadd.f32 %v555, %v582
        %v585 = vadd.f32 %v556, %v583
        %586 = vrot.lane.b32.xlu0 %v430, 113
        %v587 = vpop.permute.xlu0 %586
        %588 = vrot.lane.b32.xlu0 %v431, 113
        %v589 = vpop.permute.xlu0 %588
        %vm590 = vcmp.lt.s32.totalorder %v444, 113
        %v591 = vsel %vm590, %v587, %v589
        %v592 = vsel %vm590, %v589, %v587
        %v594 = vlaneseq
        %v595 = vshrl.u32 %v594, 7
        %v596 = vsub.s32 0, %v595
        %v597 = vrot.slane %v360, %v596
        %v598 = vlaneseq
        %v599 = vshrl.u32 %v598, 7
        %v600 = vsub.s32 1, %v599
        %v601 = vrot.slane %v360, %v600
        %v604 = vmul.f32 %v597, %v591
        %v605 = vmul.f32 %v601, %v592
        %607 = vset.pattern.permute.xlu0 0
        %608 = vperm.xlu0 %607, %v345
        %v609 = vpop.permute.xlu0 %608
        %v611 = vmul.f32 %v609, %v604
        %v612 = vmul.f32 %v609, %v605
        %v613 = vadd.f32 %v584, %v611
        %v614 = vadd.f32 %v585, %v612
        %615 = vrot.lane.b32.xlu0 %v430, 112
        %v616 = vpop.permute.xlu0 %615
        %617 = vrot.lane.b32.xlu0 %v431, 112
        %v618 = vpop.permute.xlu0 %617
        %vm619 = vcmp.lt.s32.totalorder %v444, 112
        %v620 = vsel %vm619, %v616, %v618
        %v621 = vsel %vm619, %v618, %v616
        %v623 = vlaneseq
        %v624 = vshrl.u32 %v623, 7
        %v625 = vsub.s32 0, %v624
        %v626 = vrot.slane %v362, %v625
        %v627 = vlaneseq
        %v628 = vshrl.u32 %v627, 7
        %v629 = vsub.s32 1, %v628
        %v630 = vrot.slane %v362, %v629
        %v633 = vmul.f32 %v626, %v620
        %v634 = vmul.f32 %v630, %v621
        %636 = vset.pattern.permute.xlu0 0
        %637 = vperm.xlu0 %636, %v347
        %v638 = vpop.permute.xlu0 %637
        %v640 = vmul.f32 %v638, %v633
        %v641 = vmul.f32 %v638, %v634
        %v642 = vadd.f32 %v613, %v640
        %v643 = vadd.f32 %v614, %v641
        %644 = vrot.lane.b32.xlu0 %v430, 111
        %v645 = vpop.permute.xlu0 %644
        %646 = vrot.lane.b32.xlu0 %v431, 111
        %v647 = vpop.permute.xlu0 %646
        %vm648 = vcmp.lt.s32.totalorder %v444, 111
        %v649 = vsel %vm648, %v645, %v647
        %v650 = vsel %vm648, %v647, %v645
        %v652 = vlaneseq
        %v653 = vshrl.u32 %v652, 7
        %v654 = vsub.s32 0, %v653
        %v655 = vrot.slane %v364, %v654
        %v656 = vlaneseq
        %v657 = vshrl.u32 %v656, 7
        %v658 = vsub.s32 1, %v657
        %v659 = vrot.slane %v364, %v658
        %v662 = vmul.f32 %v655, %v649
        %v663 = vmul.f32 %v659, %v650
        %665 = vset.pattern.permute.xlu0 0
        %666 = vperm.xlu0 %665, %v349
        %v667 = vpop.permute.xlu0 %666
        %v669 = vmul.f32 %v667, %v662
        %v670 = vmul.f32 %v667, %v663
        %v671 = vadd.f32 %v642, %v669
        %v672 = vadd.f32 %v643, %v670
        %674 = vset.pattern.permute.xlu0 0
        %675 = vperm.xlu0 %674, %v331
        %v676 = vpop.permute.xlu0 %675
        %v678 = vadd.f32 %v671, %v676
        %v679 = vadd.f32 %v672, %v676
        %v680 = vpack.c.bf16 %v678, %v678
        %v681 = vpack.c.bf16 %v679, %v679
        %683 = vset.pattern.permute.xlu0 0
        %684 = vperm.xlu0 %683, %v332
        %v685 = vpop.permute.xlu0 %684
        %v688 = vsel %vm378, %v329, 0
        %v691 = vsel %vm382, %v680, 0
        %v694 = vsel %vm382, %v681, 0
        %696 = vmatprep.subr.bf16.mxu0 %v694
        %697 = vmatpush1.bf16.msra.mxu0 %v691
        %698 = vmatprep.subr.bf16.mxu0 0
        %699 = vmatpush1.bf16.msra.mxu0 0
        %700 = vmatprep.subr.bf16.mxu0 0
        %701 = vmatpush1.bf16.msra.mxu0 0
        %702 = vmatprep.subr.bf16.mxu0 0
        %703 = vmatpush1.bf16.msra.mxu0 0
        %704 = vmatprep.subr.bf16.mxu0 0
        %705 = vmatpush1.bf16.msra.mxu0 0
        %706 = vmatprep.subr.bf16.mxu0 0
        %707 = vmatpush1.bf16.msra.mxu0 0
        %708 = vmatprep.subr.bf16.mxu0 0
        %709 = vmatpush1.bf16.msra.mxu0 0
        %710 = vmatprep.subr.bf16.mxu0 0
        %711 = vmatpush1.bf16.msra.mxu0 0
        %712 = vmatprep.subr.bf16.mxu0 0
        %713 = vmatpush1.bf16.msra.mxu0 0
        %714 = vmatprep.subr.bf16.mxu0 0
        %715 = vmatpush1.bf16.msra.mxu0 0
        %716 = vmatprep.subr.bf16.mxu0 0
        %717 = vmatpush1.bf16.msra.mxu0 0
        %718 = vmatprep.subr.bf16.mxu0 0
        %719 = vmatpush1.bf16.msra.mxu0 0
        %720 = vmatprep.subr.bf16.mxu0 0
        %721 = vmatpush1.bf16.msra.mxu0 0
        %722 = vmatprep.subr.bf16.mxu0 0
        %723 = vmatpush1.bf16.msra.mxu0 0
        %724 = vmatprep.subr.bf16.mxu0 0
        %725 = vmatpush1.bf16.msra.mxu0 0
        %726 = vmatprep.subr.bf16.mxu0 0
        %727 = vmatpush1.bf16.msra.mxu0 0
        %728 = vmatprep.mubr.bf16.mxu0 0
        %729 = vmatmul.mubr.bf16.gmra.mrb[0].mxu0 %v688
        %v730 = vpop.f32.mrb[0].mxu0
        %v731 = vadd.f32 %v685, %v730
        %v732 = vpop.f32.mrb[0].mxu0
        %v733 = vadd.f32 %v685, %v732
        %v734 = vpop.f32.mrb[0].mxu0
        %v735 = vpop.f32.mrb[0].mxu0
        %736 = vdwg.mxu0
        %v737 = vmax.f32 %v731, 0.0
        %v738 = vmax.f32 %v733, 0.0
        %739 = vst [vmem:[%s324] sm:$0xff] %v365
        %v740 = vpack.c.bf16 %v737, %v737
        %v741 = vpack.c.bf16 %v738, %v738
        %v744 = vunpack.c.l.b16 %v740
        %v745 = vunpack.c.l.b16 %v741
        %v746 = vpack.c.b16 %v745, %v744
        %748 = vst [vmem:[%s324 + $0x8] sm:$0xff] %v746
        %s749 = scalar_lea.vmem %s292, 16 [#allocation2]
        %v750 = vld [vmem:[%s749] sm:$0xff]
        %s751 = scalar_lea.vmem %s292, 24 [#allocation2]
        %v752 = vld [vmem:[%s751] sm:$0xff]
        %v754 = vunpack.c.l.b16 %v752
        %v755 = vunpack.c.h.b16 %v752
        %v756 = vpack.c.b16 %v754, %v754
        %v757 = vpack.c.b16 %v755, %v755
        %v759 = vsel %vm382, %v756, 0
        %v762 = vsel %vm382, %v757, 0
        %764 = vmatprep.subr.bf16.mxu0 %v762
        %765 = vmatpush1.bf16.msra.mxu0 %v759
        %766 = vmatprep.subr.bf16.mxu0 0
        %767 = vmatpush1.bf16.msra.mxu0 0
        %768 = vmatprep.subr.bf16.mxu0 0
        %769 = vmatpush1.bf16.msra.mxu0 0
        %770 = vmatprep.subr.bf16.mxu0 0
        %771 = vmatpush1.bf16.msra.mxu0 0
        %772 = vmatprep.subr.bf16.mxu0 0
        %773 = vmatpush1.bf16.msra.mxu0 0
        %774 = vmatprep.subr.bf16.mxu0 0
        %775 = vmatpush1.bf16.msra.mxu0 0
        %776 = vmatprep.subr.bf16.mxu0 0
        %777 = vmatpush1.bf16.msra.mxu0 0
        %778 = vmatprep.subr.bf16.mxu0 0
        %779 = vmatpush1.bf16.msra.mxu0 0
        %780 = vmatprep.subr.bf16.mxu0 0
        %781 = vmatpush1.bf16.msra.mxu0 0
        %782 = vmatprep.subr.bf16.mxu0 0
        %783 = vmatpush1.bf16.msra.mxu0 0
        %784 = vmatprep.subr.bf16.mxu0 0
        %785 = vmatpush1.bf16.msra.mxu0 0
        %786 = vmatprep.subr.bf16.mxu0 0
        %787 = vmatpush1.bf16.msra.mxu0 0
        %788 = vmatprep.subr.bf16.mxu0 0
        %789 = vmatpush1.bf16.msra.mxu0 0
        %790 = vmatprep.subr.bf16.mxu0 0
        %791 = vmatpush1.bf16.msra.mxu0 0
        %792 = vmatprep.subr.bf16.mxu0 0
        %793 = vmatpush1.bf16.msra.mxu0 0
        %794 = vmatprep.subr.bf16.mxu0 0
        %795 = vmatpush1.bf16.msra.mxu0 0
        %796 = vmatprep.mubr.bf16.mxu0 0
        %797 = vmatmul.mubr.bf16.gmra.mrb[0].mxu0 %v380
        %v798 = vpop.f32.mrb[0].mxu0
        %v799 = vadd.f32 %v371, %v798
        %v800 = vpop.f32.mrb[0].mxu0
        %v801 = vadd.f32 %v371, %v800
        %v802 = vpop.f32.mrb[0].mxu0
        %v803 = vpop.f32.mrb[0].mxu0
        %804 = vdwg.mxu0
        %v805 = vmax.f32 %v799, 0.0
        %v806 = vmax.f32 %v801, 0.0
        %v807 = vmul.f32 %v435, %v805
        %v808 = vmul.f32 %v435, %v806
        %809 = vrot.lane.b32.xlu0 %v805, 17
        %v810 = vpop.permute.xlu0 %809
        %811 = vrot.lane.b32.xlu0 %v806, 17
        %v812 = vpop.permute.xlu0 %811
        %v813 = vsel %vm445, %v810, %v812
        %v814 = vsel %vm445, %v812, %v810
        %v815 = vmul.f32 %v452, %v814
        %v816 = vmul.f32 %v456, %v813
        %v817 = vmul.f32 %v464, %v815
        %v818 = vmul.f32 %v464, %v816
        %v819 = vadd.f32 %v807, %v817
        %v820 = vadd.f32 %v808, %v818
        %821 = vrot.lane.b32.xlu0 %v805, 16
        %v822 = vpop.permute.xlu0 %821
        %823 = vrot.lane.b32.xlu0 %v806, 16
        %v824 = vpop.permute.xlu0 %823
        %v825 = vsel %vm474, %v822, %v824
        %v826 = vsel %vm474, %v824, %v822
        %v827 = vmul.f32 %v481, %v826
        %v828 = vmul.f32 %v485, %v825
        %v829 = vmul.f32 %v493, %v827
        %v830 = vmul.f32 %v493, %v828
        %v831 = vadd.f32 %v819, %v829
        %v832 = vadd.f32 %v820, %v830
        %833 = vrot.lane.b32.xlu0 %v805, 15
        %v834 = vpop.permute.xlu0 %833
        %835 = vrot.lane.b32.xlu0 %v806, 15
        %v836 = vpop.permute.xlu0 %835
        %v837 = vsel %vm503, %v834, %v836
        %v838 = vsel %vm503, %v836, %v834
        %v839 = vmul.f32 %v510, %v838
        %v840 = vmul.f32 %v514, %v837
        %v841 = vmul.f32 %v522, %v839
        %v842 = vmul.f32 %v522, %v840
        %v843 = vadd.f32 %v831, %v841
        %v844 = vadd.f32 %v832, %v842
        %845 = vrot.lane.b32.xlu0 %v805, 1
        %v846 = vpop.permute.xlu0 %845
        %847 = vrot.lane.b32.xlu0 %v806, 1
        %v848 = vpop.permute.xlu0 %847
        %v849 = vsel %vm532, %v846, %v848
        %v850 = vsel %vm532, %v848, %v846
        %v851 = vmul.f32 %v539, %v850
        %v852 = vmul.f32 %v543, %v849
        %v853 = vmul.f32 %v551, %v851
        %v854 = vmul.f32 %v551, %v852
        %v855 = vadd.f32 %v843, %v853
        %v856 = vadd.f32 %v844, %v854
        %857 = vrot.lane.b32.xlu0 %v805, 127
        %v858 = vpop.permute.xlu0 %857
        %859 = vrot.lane.b32.xlu0 %v806, 127
        %v860 = vpop.permute.xlu0 %859
        %v861 = vsel %vm561, %v858, %v860
        %v862 = vsel %vm561, %v860, %v858
        %v863 = vmul.f32 %v568, %v861
        %v864 = vmul.f32 %v572, %v862
        %v865 = vmul.f32 %v580, %v863
        %v866 = vmul.f32 %v580, %v864
        %v867 = vadd.f32 %v855, %v865
        %v868 = vadd.f32 %v856, %v866
        %869 = vrot.lane.b32.xlu0 %v805, 113
        %v870 = vpop.permute.xlu0 %869
        %871 = vrot.lane.b32.xlu0 %v806, 113
        %v872 = vpop.permute.xlu0 %871
        %v873 = vsel %vm590, %v870, %v872
        %v874 = vsel %vm590, %v872, %v870
        %v875 = vmul.f32 %v597, %v873
        %v876 = vmul.f32 %v601, %v874
        %v877 = vmul.f32 %v609, %v875
        %v878 = vmul.f32 %v609, %v876
        %v879 = vadd.f32 %v867, %v877
        %v880 = vadd.f32 %v868, %v878
        %881 = vrot.lane.b32.xlu0 %v805, 112
        %v882 = vpop.permute.xlu0 %881
        %883 = vrot.lane.b32.xlu0 %v806, 112
        %v884 = vpop.permute.xlu0 %883
        %v885 = vsel %vm619, %v882, %v884
        %v886 = vsel %vm619, %v884, %v882
        %v887 = vmul.f32 %v626, %v885
        %v888 = vmul.f32 %v630, %v886
        %v889 = vmul.f32 %v638, %v887
        %v890 = vmul.f32 %v638, %v888
        %v891 = vadd.f32 %v879, %v889
        %v892 = vadd.f32 %v880, %v890
        %893 = vrot.lane.b32.xlu0 %v805, 111
        %v894 = vpop.permute.xlu0 %893
        %895 = vrot.lane.b32.xlu0 %v806, 111
        %v896 = vpop.permute.xlu0 %895
        %v897 = vsel %vm648, %v894, %v896
        %v898 = vsel %vm648, %v896, %v894
        %v899 = vmul.f32 %v655, %v897
        %v900 = vmul.f32 %v659, %v898
        %v901 = vmul.f32 %v667, %v899
        %v902 = vmul.f32 %v667, %v900
        %v903 = vadd.f32 %v891, %v901
        %v904 = vadd.f32 %v892, %v902
        %v905 = vadd.f32 %v903, %v676
        %v906 = vadd.f32 %v904, %v676
        %v907 = vpack.c.bf16 %v905, %v905
        %v908 = vpack.c.bf16 %v906, %v906
        %v910 = vsel %vm382, %v907, 0
        %v913 = vsel %vm382, %v908, 0
        %915 = vmatprep.subr.bf16.mxu0 %v913
        %916 = vmatpush1.bf16.msra.mxu0 %v910
        %917 = vmatprep.subr.bf16.mxu0 0
        %918 = vmatpush1.bf16.msra.mxu0 0
        %919 = vmatprep.subr.bf16.mxu0 0
        %920 = vmatpush1.bf16.msra.mxu0 0
        %921 = vmatprep.subr.bf16.mxu0 0
        %922 = vmatpush1.bf16.msra.mxu0 0
        %923 = vmatprep.subr.bf16.mxu0 0
        %924 = vmatpush1.bf16.msra.mxu0 0
        %925 = vmatprep.subr.bf16.mxu0 0
        %926 = vmatpush1.bf16.msra.mxu0 0
        %927 = vmatprep.subr.bf16.mxu0 0
        %928 = vmatpush1.bf16.msra.mxu0 0
        %929 = vmatprep.subr.bf16.mxu0 0
        %930 = vmatpush1.bf16.msra.mxu0 0
        %931 = vmatprep.subr.bf16.mxu0 0
        %932 = vmatpush1.bf16.msra.mxu0 0
        %933 = vmatprep.subr.bf16.mxu0 0
        %934 = vmatpush1.bf16.msra.mxu0 0
        %935 = vmatprep.subr.bf16.mxu0 0
        %936 = vmatpush1.bf16.msra.mxu0 0
        %937 = vmatprep.subr.bf16.mxu0 0
        %938 = vmatpush1.bf16.msra.mxu0 0
        %939 = vmatprep.subr.bf16.mxu0 0
        %940 = vmatpush1.bf16.msra.mxu0 0
        %941 = vmatprep.subr.bf16.mxu0 0
        %942 = vmatpush1.bf16.msra.mxu0 0
        %943 = vmatprep.subr.bf16.mxu0 0
        %944 = vmatpush1.bf16.msra.mxu0 0
        %945 = vmatprep.subr.bf16.mxu0 0
        %946 = vmatpush1.bf16.msra.mxu0 0
        %947 = vmatprep.mubr.bf16.mxu0 0
        %948 = vmatmul.mubr.bf16.gmra.mrb[0].mxu0 %v688
        %v949 = vpop.f32.mrb[0].mxu0
        %v950 = vadd.f32 %v685, %v949
        %v951 = vpop.f32.mrb[0].mxu0
        %v952 = vadd.f32 %v685, %v951
        %v953 = vpop.f32.mrb[0].mxu0
        %v954 = vpop.f32.mrb[0].mxu0
        %955 = vdwg.mxu0
        %v956 = vmax.f32 %v950, 0.0
        %v957 = vmax.f32 %v952, 0.0
        %s958 = scalar_lea.vmem %s324, 16 [#allocation5]
        %959 = vst [vmem:[%s958] sm:$0xff] %v750
        %v960 = vpack.c.bf16 %v956, %v956
        %v961 = vpack.c.bf16 %v957, %v957
        %v964 = vunpack.c.l.b16 %v960
        %v965 = vunpack.c.l.b16 %v961
        %v966 = vpack.c.b16 %v965, %v964
        %968 = vst [vmem:[%s958 + $0x8] sm:$0xff] %v966
        %s969 = sand.u32 %s206, 1
        %s970 = scalar_lea.sflag [#allocation4], %s969
        %s971 = sand.u32 %s206, 1
        %s972 = smul.addr %s971, 32
        %s973 = scalar_lea.vmem [#allocation5], %s972
        // Predicated region
        $region57: #{tpu_custom_call.1} parent=51 // pred_check
          %p974 = pneg %p216
        $region58: #{tpu_custom_call.1} parent=51 // pred_check_branch
          %976 = sbr.rel (%p974) target = $region60
        $region59: #{tpu_custom_call.1} parent=51 // pred_region
          %s977 = smul.u32 2, %s25
          %s979 = ssub.s32 512, 512
          %980 = vsyncadd %s970, %s979
          %s981 = smul.addr %s977, 4
          %s982 = smul.addr %s981, 64
          %s983 = scalar_lea.hbm %s8, %s982
          %s984 = sshll.u32 %s973, 4
          %s985 = int_to_ptr.vmem [resolvable:$true] %s984
          %990 = dma.vmem_to_hbm [thread:$0]  %s985, 512, %s983, %s970, 256, 256, 16
        $region60: #{tpu_custom_call.1} parent=51 // pred_fallthru
          _
      $region52: #{tpu_custom_call.1} parent=5 // pred_fallthru
        _
      %p991 = scmp.le.s32.totalorder 2, %s20
      // Predicated region
      $region61: #{tpu_custom_call.1} parent=5 // pred_check
        %p992 = pneg %p991
      $region62: #{tpu_custom_call.1} parent=5 // pred_check_branch
        %994 = sbr.rel (%p992) target = $region64
      $region63: #{tpu_custom_call.1} parent=5 // pred_region
        %s995 = ssub.s32 %s20, 2
        // Predicated region
        $region65: #{tpu_custom_call.1} parent=63 // pred_check
          %p996 = pneg %p222
        $region66: #{tpu_custom_call.1} parent=63 // pred_check_branch
          %998 = sbr.rel (%p996) target = $region68
        $region67: #{tpu_custom_call.1} parent=63 // pred_region
          %s999 = sand.u32 %s207, 1
          %s1000 = scalar_lea.sflag [#allocation4], %s999
          %s1001 = sand.u32 %s207, 1
          %s1002 = smul.addr %s1001, 32
          %s1003 = scalar_lea.vmem [#allocation5], %s1002
          %1004 = dma.done %s1000, 512
        $region68: #{tpu_custom_call.1} parent=63 // pred_fallthru
          _
      $region64: #{tpu_custom_call.1} parent=5 // pred_fallthru
        _
    $region6: #{tpu_custom_call.1} parent=1 // loop_footer
      %s24 = sadd.s32 1, %s20
    $region7: #{tpu_custom_call.1} parent=1 // loop_footer_branch
      %19 = sbr.rel target = $region3
    $region8: #{tpu_custom_call.1} parent=1 // loop_exit
      _
    %1005 = vsyncpa [#allocation3], 1
    %s1006 = scalar_lea.sflag [#allocation3], 1
    %1007 = vsyncpa %s1006, 1
    %1008 = vsyncpa [#allocation4], 1
    %s1009 = scalar_lea.sflag [#allocation4], 1
    %1010 = vsyncpa %s1009, 1

</llo_original>
